<compile_context>
chip_gen: v7x
topology: tpu7x:2x2x1
jax: 0.10.0
libtpu: 0.0.40
codegen_flags: <defaults>
</compile_context>

<pallas_src>
import functools

import jax
import jax.numpy as jnp
from jax import lax
from jax.experimental import pallas as pl
from jax.experimental.pallas import tpu as pltpu


def _round_up(x, m):
    return ((x + m - 1) // m) * m


def _vmem_capacity_bytes():
    try:
        info = pltpu.get_tpu_info()
        cap = int(getattr(info, "vmem_capacity_bytes", 0))
        if cap > 0:
            return cap
    except Exception:
        pass
    return 64 * 1024 * 1024  # conservative default (v7x-class: 64 MiB / TC)


# ---------------------------------------------------------------------------
# Kernels
# ---------------------------------------------------------------------------
def _lowrank_fused_kernel(x_ref, w_ref, bias_ref, o_ref):
    """out = x @ W + b with W = A @ B pre-fused in the wrapper.
    Only used when in_features and out_features are both small (see wrapper)."""
    acc = jnp.dot(x_ref[...], w_ref[...], preferred_element_type=jnp.float32)
    acc = acc + bias_ref[...].astype(jnp.float32)  # (1, tn) broadcasts over rows
    o_ref[...] = acc.astype(o_ref.dtype)


def _lowrank_twostep_kernel(x_ref, a_ref, b_ref, bias_ref, o_ref, *,
                            m_chunk, n_chunks, cast_bf16):
    """out = (x @ A) @ B + b.  M is processed in m_chunk-row slices so the
    (m_chunk, rank) f32 intermediate stays small (bounded vreg/VMEM pressure)."""
    bias = bias_ref[...].astype(jnp.float32)  # hoisted out of the chunk loop

    def chunk(c, carry):
        r0 = pl.multiple_of(c * m_chunk, m_chunk)
        xs = x_ref[pl.ds(r0, m_chunk), :]
        t = jnp.dot(xs, a_ref[...], preferred_element_type=jnp.float32)
        if cast_bf16:
            # bf16 activations/weights: keep both MXU passes in bf16,
            # accumulation stays f32.
            t = t.astype(jnp.bfloat16)
        acc = jnp.dot(t, b_ref[...], preferred_element_type=jnp.float32)
        o_ref[pl.ds(r0, m_chunk), :] = (acc + bias).astype(o_ref.dtype)
        return carry

    lax.fori_loop(0, n_chunks, chunk, 0, unroll=True)


# ---------------------------------------------------------------------------
# Wrapper
# ---------------------------------------------------------------------------
@functools.partial(jax.jit, static_argnames=("tile_m", "tile_n"))
def lowrank_forward(x, A, B, b=None, *, tile_m=512, tile_n=512):
    """x: (..., in_features); A: (in_features, rank); B: (rank, out_features);
    b: (out_features,) or None (bias=False)."""
    in_features, rank = A.shape
    out_features = B.shape[1]
    lead = x.shape[:-1]

    x2 = x.reshape(-1, in_features)
    M = x2.shape[0]

    # MXU operands share x's dtype: weights are tiny, casting them is cheap and
    # avoids mixed-dtype matmuls / silent downcasts of the intermediate.
    A = A.astype(x.dtype)
    B = B.astype(x.dtype)
    if b is None:
        b = jnp.zeros((out_features,), dtype=x.dtype)
    bias2 = b.reshape(1, out_features)

    # --- fuse decision ------------------------------------------------------
    # Fuse only when the dense (in, out) matmul does not exceed the MXU work /
    # HBM weight traffic of the (contraction-padded) two-step path.
    k_eff = max(rank, 128)  # MXU contraction fill floor
    fuse = in_features * out_features <= k_eff * (in_features + out_features)

    # --- tile selection -----------------------------------------------------
    row_align = 16 if x.dtype == jnp.bfloat16 else 8
    tm = max(row_align, min(_round_up(tile_m, row_align), _round_up(M, row_align)))
    tn = max(128, min(_round_up(tile_n, 128), _round_up(out_features, 128)))

    # Generation-aware VMEM budget (headroom for Mosaic internal scratch).
    vmem_cap = _vmem_capacity_bytes()
    if vmem_cap <= 64 * 1024 * 1024:          # v7x-class: 64 MiB / TC
        vmem_budget, vmem_limit = 36 * 1024 * 1024, 42 * 1024 * 1024
    else:                                     # v5e / v6e: 128 MiB
        vmem_budget, vmem_limit = 88 * 1024 * 1024, 100 * 1024 * 1024

    isz = jnp.dtype(x.dtype).itemsize
    bsz = jnp.dtype(bias2.dtype).itemsize

    def _vmem_bytes(tm_, tn_):
        xb = 2 * tm_ * in_features * isz            # x (double-buffered)
        ob = 2 * tm_ * tn_ * isz                    # out (double-buffered)
        if fuse:
            wb = 2 * in_features * tn_ * isz        # fused W
        else:
            wb = 2 * (in_features * rank + rank * tn_) * isz  # A + B
        return xb + ob + wb + 2 * tn_ * bsz

    # Shrink tiles to fit the budget, clamping at the MXU-efficient floor (256)
    # unless unavoidable; shrink the dominant VMEM consumer first.
    # NOTE: for truly extreme in_features a K-tiled accumulator grid would be
    # preferable to shrinking tm; not needed for typical HADL shapes.
    min_tm = min(tm, 256)
    min_tn = min(tn, 256)

    def _halve(v, lo, align):
        return max(lo, _round_up(v // 2, align))

    for _ in range(64):
        if _vmem_bytes(tm, tn) <= vmem_budget:
            break
        if fuse and tn > min_tn:          # fused: (in, tn) W block dominates
            tn = _halve(tn, min_tn, 128)
        elif tm > min_tm:                 # two-step: (tm, in) x block dominates
            tm = _halve(tm, min_tm, row_align)
        elif tn > min_tn:
            tn = _halve(tn, min_tn, 128)
        elif tm > row_align:              # last resort: go below the MXU floor
            tm = _halve(tm, row_align, row_align)
        elif tn > 128:
            tn = _halve(tn, 128, 128)
        else:
            break

    grid_m = pl.cdiv(M, tm)
    grid_n = pl.cdiv(out_features, tn)

    # Grid order: M outer / N inner -> the x block index only depends on the
    # outer axis, so Pallas keeps it resident across the inner N sweep and x is
    # DMA'd from HBM exactly once.  Weights/bias stream (default Buffered(2)).
    x_spec = pl.BlockSpec((tm, in_features), lambda i, j: (i, 0))
    bias_spec = pl.BlockSpec((1, tn), lambda i, j: (0, j))
    out_spec = pl.BlockSpec((tm, tn), lambda i, j: (i, j))

    if fuse:
        # Small dims: single full-width matmul.  W built per call at default
        # precision (cheap here because in*out is small by construction).
        W = jnp.dot(A, B, preferred_element_type=jnp.float32).astype(x.dtype)
        kernel = _lowrank_fused_kernel
        operands = (W,)
        weight_specs = [pl.BlockSpec((in_features, tn), lambda i, j: (0, j))]
        flops = 2 * M * in_features * out_features
        weight_bytes = in_features * out_features * isz
    else:
        if rank >= 64 and tm > 128 and tm % 128 == 0:
            m_chunk = 128                 # cap the (chunk, rank) f32 intermediate
        else:
            m_chunk = tm
        kernel = functools.partial(
            _lowrank_twostep_kernel,
            m_chunk=m_chunk,
            n_chunks=tm // m_chunk,
            cast_bf16=(x.dtype == jnp.bfloat16),
        )
        operands = (A, B)
        weight_specs = [
            pl.BlockSpec((in_features, rank), lambda i, j: (0, 0)),  # A: constant block
            pl.BlockSpec((rank, tn), lambda i, j: (0, j)),
        ]
        flops = 2 * M * rank * (in_features + out_features)
        weight_bytes = (in_features * rank + rank * out_features) * isz

    bytes_accessed = int(
        x2.size * isz                      # x streamed once (resident across N)
        + grid_m * weight_bytes            # small weights re-streamed per M tile
        + grid_m * bias2.size * bsz
        + M * out_features * isz           # output written once
    )

    out2 = pl.pallas_call(
        kernel,
        out_shape=jax.ShapeDtypeStruct((M, out_features), x.dtype),
        grid=(grid_m, grid_n),
        in_specs=[x_spec] + weight_specs + [bias_spec],
        out_specs=out_spec,
        compiler_params=pltpu.CompilerParams(
            # Shard M across TensorCores (megacore): the big x stream is read
            # once per chip; the inner N axis stays sequential.
            dimension_semantics=("parallel", "arbitrary"),
            vmem_limit_bytes=vmem_limit,
        ),
        cost_estimate=pl.CostEstimate(
            flops=int(flops), transcendentals=0, bytes_accessed=bytes_accessed),
    )(x2, *operands, bias2)

    return out2.reshape(*lead, out_features)


# ---------------------------------------------------------------------------
# Host-side init mirroring the PyTorch module + pure-JAX reference
# ---------------------------------------------------------------------------
def init_lowrank_params(key, in_features, out_features, rank, dtype=jnp.float32):
    """A: orthogonal (in_features, rank), B: orthogonal (rank, out_features),
    b: uniform[0, 1) (out_features,) — same semantics as the nn.Module init."""
    kA, kB, kb = jax.random.split(key, 3)

    def orthogonal(k, shape):
        rows, cols = shape
        flat = jax.random.normal(k, (max(rows, cols), min(rows, cols)),
                                 dtype=jnp.float32)
        q, r = jnp.linalg.qr(flat)
        d = jnp.sign(jnp.diagonal(r))
        d = jnp.where(d == 0, 1.0, d)
        q = q * d
        if rows < cols:
            q = q.T
        return q[:rows, :cols].astype(dtype)

    A = orthogonal(kA, (in_features, rank))
    B = orthogonal(kB, (rank, out_features))
    b = jax.random.uniform(kb, (out_features,), dtype=dtype)
    return A, B, b


def _reference(x, A, B, b=None):
    hp = jax.lax.Precision.HIGHEST
    out = jnp.dot(jnp.dot(x, A, precision=hp), B, precision=hp)
    if b is not None:
        out = out + b
    return out


if __name__ == "__main__":
    key = jax.random.PRNGKey(0)
    k1, k2, k3, k4, k5 = jax.random.split(key, 5)

    # 1) Small dims -> fuse criterion satisfied -> fused one-matmul kernel.
    batch, seq, in_f, rank, out_f = 2, 8, 32, 8, 32
    x = jax.random.normal(k1, (batch, seq, in_f), dtype=jnp.float32)
    A, B, b = init_lowrank_params(k2, in_f, out_f, rank)
    out = jax.block_until_ready(lowrank_forward(x, A, B, b))
    ref = _reference(x, A, B, b)
    assert out.shape == (batch, seq, out_f)
    assert jnp.allclose(out, ref, atol=3e-2, rtol=1e-2), \
        float(jnp.max(jnp.abs(out - ref)))

    # 2) Larger dims -> two-step kernel, M chunking (3 x 128-row chunks),
    #    N tiling with a ragged (non-divisible) last N tile.
    batch2, seq2, in2, rank2, out2_f = 3, 128, 256, 128, 640
    x_b = jax.random.normal(k3, (batch2, seq2, in2), dtype=jnp.float32)
    A2, B2, b2 = init_lowrank_params(k4, in2, out2_f, rank2)
    out_b = jax.block_until_ready(lowrank_forward(x_b, A2, B2, b2))
    ref_b = _reference(x_b, A2, B2, b2)
    assert out_b.shape == (batch2, seq2, out2_f)
    assert jnp.allclose(out_b, ref_b, atol=3e-2, rtol=1e-2), \
        float(jnp.max(jnp.abs(out_b - ref_b)))

    # 3) bias=False path with a ragged M tile (M=14 vs tm=16).
    x_c = jax.random.normal(k5, (2, 7, in_f), dtype=jnp.float32)
    out_c = jax.block_until_ready(lowrank_forward(x_c, A, B, None))
    ref_c = _reference(x_c, A, B, None)
    assert out_c.shape == (2, 7, out_f)
    assert jnp.allclose(out_c, ref_c, atol=3e-2, rtol=1e-2), \
        float(jnp.max(jnp.abs(out_c - ref_c)))

    print("KERNEL_OK")
</pallas_src>

<mosaic_0001>
module attributes {stable_mosaic.version = 11 : i64} {
  func.func @_lowrank_fused_kernel(%arg0: i32, %arg1: i32, %arg2: memref<16x32xf32, #tpu.memory_space<vmem>>, %arg3: memref<32x128xf32, #tpu.memory_space<vmem>>, %arg4: memref<1x128xf32, #tpu.memory_space<vmem>>, %arg5: memref<16x128xf32, #tpu.memory_space<vmem>>) attributes {dimension_semantics = [#tpu.dimension_semantics<parallel>, #tpu.dimension_semantics<arbitrary>], iteration_bounds = array<i64: 1, 1>, scalar_prefetch = 0 : i64, scratch_operands = 0 : i64, tpu.core_type = #tpu.core_type<tc>, window_params = [{transform_indices = @transform_0, window_bounds = array<i64: 16, 32>}, {transform_indices = @transform_1, window_bounds = array<i64: 32, 128>}, {transform_indices = @transform_2, window_bounds = array<i64: 1, 128>}, {transform_indices = @transform_3, window_bounds = array<i64: 16, 128>}]} {
    %c0 = arith.constant 0 : index
    %c0_0 = arith.constant 0 : index
    %0 = vector.load %arg2[%c0, %c0_0] : memref<16x32xf32, #tpu.memory_space<vmem>>, vector<16x32xf32>
    %c0_1 = arith.constant 0 : index
    %c0_2 = arith.constant 0 : index
    %1 = vector.load %arg3[%c0_1, %c0_2] : memref<32x128xf32, #tpu.memory_space<vmem>>, vector<32x128xf32>
    %cst = arith.constant dense<0.000000e+00> : vector<16x128xf32>
    %2 = tpu.matmul %0, %1, %cst {dimension_numbers = #tpu.dot_dimension_numbers<[1], [0], [0], [1], [0, 0, 1, 1], [], []>} : vector<16x32xf32>, vector<32x128xf32>, vector<16x128xf32> -> vector<16x128xf32>
    %c0_3 = arith.constant 0 : index
    %c0_4 = arith.constant 0 : index
    %3 = vector.load %arg4[%c0_3, %c0_4] : memref<1x128xf32, #tpu.memory_space<vmem>>, vector<1x128xf32>
    %4 = vector.broadcast %3 : vector<1x128xf32> to vector<16x128xf32>
    %5 = arith.addf %2, %4 : vector<16x128xf32>
    %c0_5 = arith.constant 0 : index
    %c0_6 = arith.constant 0 : index
    %6 = vector.load %arg5[%c0_5, %c0_6] : memref<16x128xf32, #tpu.memory_space<vmem>>, vector<16x128xf32>
    tpu.vector_store %arg5[%c0_5, %c0_6], %5 {strides = array<i32>} : memref<16x128xf32, #tpu.memory_space<vmem>>, vector<16x128xf32>,
    return
  }
  func.func @transform_0(%arg0: i32, %arg1: i32) -> (i32, i32) {
    %c0_i32 = arith.constant 0 : i32
    %c0_i32_0 = arith.constant 0 : i32
    return %arg0, %c0_i32 : i32, i32
  }
  func.func @transform_1(%arg0: i32, %arg1: i32) -> (i32, i32) {
    %c0_i32 = arith.constant 0 : i32
    %c0_i32_0 = arith.constant 0 : i32
    return %c0_i32, %arg1 : i32, i32
  }
  func.func @transform_2(%arg0: i32, %arg1: i32) -> (i32, i32) {
    %c0_i32 = arith.constant 0 : i32
    %c0_i32_0 = arith.constant 0 : i32
    return %c0_i32, %arg1 : i32, i32
  }
  func.func @transform_3(%arg0: i32, %arg1: i32) -> (i32, i32) {
    %c0_i32 = arith.constant 0 : i32
    return %arg0, %arg1 : i32, i32
  }
}

</mosaic_0001>

<llo_original>
// kernel: lowrank_forward.1
$region0: #{lowrank_forward.1}
  #allocation0 [shape = 'u32[]', space=smem, size = 0x4, offset = 0x4, fixed_abs, tag = 'smem constant byte address 0x4 - core index']
  #allocation1 [shape = 'u32[144,128]{1,0:T(1,128)}', space=vmem, size = 0x12000, scoped, tag = 'internal scratch']
  %s0 = inlined_call_operand.vmem [shape: f32[16,32], index: 0, kind: input, shape index: {}]
  %s1 = inlined_call_operand.vmem [shape: f32[32,32], index: 1, kind: input, shape index: {}]
  %s2 = inlined_call_operand.vmem [shape: f32[1,32], index: 2, kind: input, shape index: {}]
  %s3 = inlined_call_operand.hbm [shape: f32[16,32], index: 3, kind: output, shape index: {}]
  %s4 = sld [smem:[#allocation0]]
  $region22: #{lowrank_forward.1} parent=0
    _
  %s6 = ssub.s32 1, %s4
  %s7 = scalar_select 0, %s6, %s4
  $region1: #{lowrank_forward.1} parent=0
    #allocation2 [shape = 'u8[8192]{0}', space=vmem, size = 0x2000, scoped, tag = 'output window, operand 0, single buffered']
    #allocation3 [shape = 's32[1]{0}', space=sflag, size = 0x4, scoped, tag = 'scoped memory for lowrank_forward.1']
    %8 = vsyncpa [#allocation3], 0
    // Predicated region
    $region2: #{lowrank_forward.1} parent=1 // pred_check
      _
    $region3: #{lowrank_forward.1} parent=1 // pred_check_branch
      %10 = sbr.rel (0) target = $region5
    $region4: #{lowrank_forward.1} parent=1 // pred_region
      _
    $region5: #{lowrank_forward.1} parent=1 // pred_fallthru
      _
    // Predicated region
    $region6: #{lowrank_forward.1} parent=1 // pred_check
      _
    $region7: #{lowrank_forward.1} parent=1 // pred_check_branch
      %12 = sbr.rel (0) target = $region9
    $region8: #{lowrank_forward.1} parent=1 // pred_region
      _
    $region9: #{lowrank_forward.1} parent=1 // pred_fallthru
      _
    // Predicated region
    $region10: #{lowrank_forward.1} parent=1 // pred_check
      _
    $region11: #{lowrank_forward.1} parent=1 // pred_check_branch
      %14 = sbr.rel (0) target = $region13
    $region12: #{lowrank_forward.1} parent=1 // pred_region
      _
    $region13: #{lowrank_forward.1} parent=1 // pred_fallthru
      _
    %v15 = vld [vmem:[%s0] sm:$0xff]
    %v16 = vld [vmem:[%s0 + $0x8] sm:$0xff]
    %v17 = vld [vmem:[%s1] sm:$0xff]
    %v18 = vld [vmem:[%s1 + $0x8] sm:$0xff]
    %v19 = vld [vmem:[%s1 + $0x10] sm:$0xff]
    %v20 = vld [vmem:[%s1 + $0x18] sm:$0xff]
    %v21 = vld [vmem:[%s2] sm:$0x1]
    %v23 = vlaneseq
    %v24 = vshrl.u32 %v23, 7
    %v25 = vsub.s32 0, %v24
    %v26 = vrot.slane %v21, %v25
    %vm28 = vcmask 261120
    %v30 = vsel %vm28, %v15, 0
    %v33 = vsel %vm28, %v16, 0
    %35 = vmatprep.subr.mxu0 0.0
    %36 = vmatpush1.msra.mxu0 %v17
    %37 = vmatprep.subr.mxu0 0.0
    %38 = vmatpush1.msra.mxu0 %v18
    %39 = vmatprep.subr.mxu0 0.0
    %40 = vmatpush1.msra.mxu0 %v19
    %41 = vmatprep.subr.mxu0 0.0
    %42 = vmatpush1.msra.mxu0 %v20
    %43 = vmatprep.subr.mxu0 0.0
    %44 = vmatpush1.msra.mxu0 0.0
    %45 = vmatprep.subr.mxu0 0.0
    %46 = vmatpush1.msra.mxu0 0.0
    %47 = vmatprep.subr.mxu0 0.0
    %48 = vmatpush1.msra.mxu0 0.0
    %49 = vmatprep.subr.mxu0 0.0
    %50 = vmatpush1.msra.mxu0 0.0
    %51 = vmatprep.subr.mxu0 0.0
    %52 = vmatpush1.msra.mxu0 0.0
    %53 = vmatprep.subr.mxu0 0.0
    %54 = vmatpush1.msra.mxu0 0.0
    %55 = vmatprep.subr.mxu0 0.0
    %56 = vmatpush1.msra.mxu0 0.0
    %57 = vmatprep.subr.mxu0 0.0
    %58 = vmatpush1.msra.mxu0 0.0
    %59 = vmatprep.subr.mxu0 0.0
    %60 = vmatpush1.msra.mxu0 0.0
    %61 = vmatprep.subr.mxu0 0.0
    %62 = vmatpush1.msra.mxu0 0.0
    %63 = vmatprep.subr.mxu0 0.0
    %64 = vmatpush1.msra.mxu0 0.0
    %65 = vmatprep.subr.mxu0 0.0
    %66 = vmatpush1.msra.mxu0 0.0
    %67 = vmatprep.subr.mxu0 0.0
    %68 = vmatpush1.msra.mxu0 0.0
    %69 = vmatprep.subr.mxu0 0.0
    %70 = vmatpush1.msra.mxu0 0.0
    %71 = vmatprep.subr.mxu0 0.0
    %72 = vmatpush1.msra.mxu0 0.0
    %73 = vmatprep.subr.mxu0 0.0
    %74 = vmatpush1.msra.mxu0 0.0
    %75 = vmatprep.subr.mxu0 0.0
    %76 = vmatpush1.msra.mxu0 0.0
    %77 = vmatprep.subr.mxu0 0.0
    %78 = vmatpush1.msra.mxu0 0.0
    %79 = vmatprep.subr.mxu0 0.0
    %80 = vmatpush1.msra.mxu0 0.0
    %81 = vmatprep.subr.mxu0 0.0
    %82 = vmatpush1.msra.mxu0 0.0
    %83 = vmatprep.subr.mxu0 0.0
    %84 = vmatpush1.msra.mxu0 0.0
    %85 = vmatprep.subr.mxu0 0.0
    %86 = vmatpush1.msra.mxu0 0.0
    %87 = vmatprep.subr.mxu0 0.0
    %88 = vmatpush1.msra.mxu0 0.0
    %89 = vmatprep.subr.mxu0 0.0
    %90 = vmatpush1.msra.mxu0 0.0
    %91 = vmatprep.subr.mxu0 0.0
    %92 = vmatpush1.msra.mxu0 0.0
    %93 = vmatprep.subr.mxu0 0.0
    %94 = vmatpush1.msra.mxu0 0.0
    %95 = vmatprep.subr.mxu0 0.0
    %96 = vmatpush1.msra.mxu0 0.0
    %97 = vmatprep.subr.mxu0 0.0
    %98 = vmatpush1.msra.mxu0 0.0
    %99 = vmatprep.mubr.f32.mxu0 0.0
    %100 = vmatmul.mubr.f32.gmra.mrb[0].mxu0 %v30
    %v101 = vpop.f32.mrb[0].mxu0
    %v102 = vadd.f32 %v26, %v101
    %v103 = vpop.f32.mrb[0].mxu0
    %104 = vmatprep.mubr.f32.mxu0 0.0
    %105 = vmatmul.mubr.f32.gmra.mrb[0].mxu0 %v33
    %v106 = vpop.f32.mrb[0].mxu0
    %v107 = vadd.f32 %v26, %v106
    %v108 = vpop.f32.mrb[0].mxu0
    %109 = vdwg.mxu0
    %110 = vst [vmem:[#allocation2] sm:$0xff] %v102
    %111 = vst [vmem:[#allocation2 + $0x8] sm:$0xff] %v107
    // Predicated region
    $region14: #{lowrank_forward.1} parent=1 // pred_check
      _
    $region15: #{lowrank_forward.1} parent=1 // pred_check_branch
      %113 = sbr.rel (0) target = $region17
    $region16: #{lowrank_forward.1} parent=1 // pred_region
      %s115 = ssub.s32 256, 256
      %116 = vsyncadd [#allocation3], %s115
      %s117 = sshll.u32 [#allocation2], 4
      %s118 = int_to_ptr.vmem [resolvable:$true] %s117
      %123 = dma.vmem_to_hbm [thread:$0]  %s118, 256, %s3, [#allocation3], 128, 128, 8
    $region17: #{lowrank_forward.1} parent=1 // pred_fallthru
      _
    // Predicated region
    $region18: #{lowrank_forward.1} parent=1 // pred_check
      _
    $region19: #{lowrank_forward.1} parent=1 // pred_check_branch
      %125 = sbr.rel (0) target = $region21
    $region20: #{lowrank_forward.1} parent=1 // pred_region
      %126 = dma.done [#allocation3], 256
    $region21: #{lowrank_forward.1} parent=1 // pred_fallthru
      _
    %127 = vsyncpa [#allocation3], 1

</llo_original>
